<compile_context>
chip_gen: v6e
topology: v6e:2x2x1
jax: 0.10.0
libtpu: 0.0.40
codegen_flags: <defaults>
</compile_context>

<pallas_src>
import jax
import jax.numpy as jnp
import numpy as np
from jax.experimental import pallas as pl
from jax.experimental.pallas import tpu as pltpu


# ----------------------------------------------------------------------------
# Per-image tap-validity masks (row-major y*W + x flattening, same as kernel)
# ----------------------------------------------------------------------------
def _tap_masks(H, W):
    j = np.arange(H * W)
    y = j // W
    x = j % W
    m = np.zeros((9, H * W), np.float32)
    for ty in range(3):
        for tx in range(3):
            dy, dx = ty - 1, tx - 1
            ok = (y + dy >= 0) & (y + dy < H) & (x + dx >= 0) & (x + dx < W)
            m[ty * 3 + tx] = ok.astype(np.float32)
    return jnp.asarray(m)


# ----------------------------------------------------------------------------
# Kernel + wrapper
# ----------------------------------------------------------------------------
def fusion_forward(mem_nchw, vq_nchw, kparams, images_per_step=1):
    """Fusion forward. Inputs/outputs use PyTorch NCHW layout."""
    N, C, H, W = vq_nchw.shape
    C2 = 2 * C                 # output channels
    TWO_C = 2 * C              # concat input channels (== C2 for this module)
    HW = H * W
    G = images_per_step        # raise (e.g. 2) on v5e to widen the matmul lanes
    assert N % G == 0
    K = 9 * TWO_C + 1          # im2col rows + constant-1 bias row

    w_full = kparams["w_full"]             # (4*C2, K) packed conv weights + bias col
    vec = kparams["vec"]                   # (2C, 3): [bn_in_s | bn_in_b | bn_out_b]
    masks = _tap_masks(H, W)               # (9, HW), resident across grid steps

    # Free reshapes only — no transpose, no concat, no extra HBM round trip.
    vq = vq_nchw.reshape(N, C, HW)
    mem = mem_nchw.reshape(N, C, HW)

    def kernel(vq_ref, mem_ref, w_ref, v_ref, m_ref, out_ref, col_ref):
        s_in = v_ref[:, 0:1]               # (2C, 1) folded bn1|bn2 scale
        b_in = v_ref[:, 1:2]               # (2C, 1) folded bn1|bn2 bias
        bn_out_b = v_ref[:, 2:3]           # (C2, 1) final-BN bias (scale pre-folded)

        for g in range(G):
            # Branch BatchNorm (folded) + Dropout (eval -> identity) + ReLU.
            x_cat = jnp.concatenate([vq_ref[g], mem_ref[g]], axis=0)   # (2C, HW)
            xr = jnp.maximum(x_cat * s_in + b_in, 0.0)

            # im2col built directly into VMEM scratch: XLU roll + tap mask
            # (wrap-around garbage only lands on masked-out positions).
            for ty in range(3):
                for tx in range(3):
                    k = ty * 3 + tx
                    dy, dx = ty - 1, tx - 1
                    rows = slice(k * TWO_C, (k + 1) * TWO_C)
                    cols = slice(g * HW, (g + 1) * HW)
                    if dy == 0 and dx == 0:
                        col_ref[rows, cols] = xr
                    else:
                        d = dy * W + dx
                        rolled = pltpu.roll(xr, shift=(-d) % HW, axis=1)
                        col_ref[rows, cols] = rolled * m_ref[k:k + 1, :]
            # constant-1 row -> conv biases ride along in the matmul
            col_ref[9 * TWO_C:K, g * HW:(g + 1) * HW] = jnp.ones((1, HW), jnp.float32)

        # conv1 / conv2 / conv3 / conv4 (+ biases + folded final-BN scale)
        # in a single MXU matmul.
        res = jnp.dot(w_ref[...], col_ref[...],
                      preferred_element_type=jnp.float32)              # (4*C2, G*HW)

        out1 = res[0 * C2:1 * C2, :]
        out2 = res[1 * C2:2 * C2, :]
        att1 = res[2 * C2:3 * C2, :]
        att2 = res[3 * C2:4 * C2, :]

        # sigmoid = 1 / (1 + exp(-x)): exp on EUP, divide via approx reciprocal
        sig1 = pl.reciprocal(1.0 + jnp.exp(-att1), approx=True)
        sig2 = pl.reciprocal(1.0 + jnp.exp(-att2), approx=True)

        fused = out1 * sig1 + out2 * sig2 + bn_out_b
        fused = jnp.maximum(fused, 0.0)
        for g in range(G):
            out_ref[g] = fused[:, g * HW:(g + 1) * HW]                 # lane-dense store

    out = pl.pallas_call(
        kernel,
        out_shape=jax.ShapeDtypeStruct((N, C2, HW), jnp.float32),
        grid_spec=pltpu.PrefetchScalarGridSpec(
            num_scalar_prefetch=0,
            grid=(N // G,),
            in_specs=[
                pl.BlockSpec((G, C, HW), lambda n: (n, 0, 0)),     # vq block
                pl.BlockSpec((G, C, HW), lambda n: (n, 0, 0)),     # mem block
                pl.BlockSpec(w_full.shape, lambda n: (0, 0)),      # weights (resident)
                pl.BlockSpec(vec.shape, lambda n: (0, 0)),         # bn vec (resident)
                pl.BlockSpec(masks.shape, lambda n: (0, 0)),       # tap masks (resident)
            ],
            out_specs=pl.BlockSpec((G, C2, HW), lambda n: (n, 0, 0)),
            scratch_shapes=[pltpu.VMEM((K, G * HW), jnp.float32)],  # im2col scratch
        ),
        compiler_params=pltpu.CompilerParams(
            dimension_semantics=("parallel",)),                    # batch axis -> megacore
    )(vq, mem, w_full, vec, masks)

    # Free reshape back to PyTorch NCHW layout (no transpose).
    return out.reshape(N, C2, H, W)


# ----------------------------------------------------------------------------
# Parameter construction / packing
# ----------------------------------------------------------------------------
def make_params(key, C):
    """Deterministic synthetic parameters (BatchNorm pre-folded to scale/bias)."""
    C2 = 2 * C
    eps = 1e-3
    ks = jax.random.split(key, 20)

    def rnd(k, shape, scale=0.1):
        return (scale * jax.random.normal(k, shape)).astype(jnp.float32)

    def bn_fold(kg, kb, km, kv, n):
        gamma = 1.0 + rnd(kg, (n,))
        beta = rnd(kb, (n,))
        mean = rnd(km, (n,))
        var = (1.0 + 0.1 * jnp.abs(jax.random.normal(kv, (n,)))).astype(jnp.float32)
        scale = gamma / jnp.sqrt(var + eps)
        bias = beta - mean * scale
        return scale, bias

    bn1_s, bn1_b = bn_fold(ks[0], ks[1], ks[2], ks[3], C)
    bn2_s, bn2_b = bn_fold(ks[4], ks[5], ks[6], ks[7], C)
    bn_s, bn_b = bn_fold(ks[8], ks[9], ks[10], ks[11], C2)

    # Conv weights in PyTorch OIHW layout.
    w1 = rnd(ks[12], (C2, C, 3, 3))
    w2 = rnd(ks[13], (C2, C, 3, 3))
    w3 = rnd(ks[14], (C2, C2, 3, 3))
    w4 = rnd(ks[15], (C2, C2, 3, 3))
    b1 = rnd(ks[16], (C2,))
    b2 = rnd(ks[17], (C2,))
    b3 = rnd(ks[18], (C2,))
    b4 = rnd(ks[19], (C2,))

    return dict(bn1_scale=bn1_s, bn1_bias=bn1_b, bn2_scale=bn2_s, bn2_bias=bn2_b,
                bn_scale=bn_s, bn_bias=bn_b,
                w1=w1, b1=b1, w2=w2, b2=b2, w3=w3, b3=b3, w4=w4, b4=b4)


def pack_params(raw):
    """Pack parameters for the kernel: weight slab (with bias column) + bn vec."""
    C = raw["w1"].shape[1]
    C2 = 2 * C
    TWO_C = 2 * C

    def wcols(w_oihw):
        # (cout, cin, 3, 3) -> (cout, 9*cin), column index = (ty*3+tx)*cin + c
        return jnp.transpose(w_oihw, (0, 2, 3, 1)).reshape(w_oihw.shape[0], -1)

    z = jnp.zeros_like(raw["w1"])
    w1e = jnp.concatenate([raw["w1"], z], axis=1)   # conv1 acts on the vQ half only
    w2e = jnp.concatenate([z, raw["w2"]], axis=1)   # conv2 acts on the mem half only
    bn_s, bn_b = raw["bn_scale"], raw["bn_bias"]

    w_mat = jnp.concatenate([
        wcols(w1e) * bn_s[:, None],                 # final-BN scale folded in
        wcols(w2e) * bn_s[:, None],
        wcols(raw["w3"]),
        wcols(raw["w4"]),
    ], axis=0)                                      # (4*C2, 9*2C)

    b_full = jnp.concatenate([raw["b1"] * bn_s, raw["b2"] * bn_s,
                              raw["b3"], raw["b4"]])

    # bias column appended -> biases come out of the matmul via a constant-1 row
    w_full = jnp.concatenate([w_mat, b_full[:, None]], axis=1).astype(jnp.float32)

    vec = jnp.zeros((TWO_C, 3), jnp.float32)
    vec = vec.at[:, 0].set(jnp.concatenate([raw["bn1_scale"], raw["bn2_scale"]]))
    vec = vec.at[:, 1].set(jnp.concatenate([raw["bn1_bias"], raw["bn2_bias"]]))
    vec = vec.at[:, 2].set(bn_b)                    # C2 == 2C for this module

    return dict(w_full=w_full, vec=vec)


# ----------------------------------------------------------------------------
# Pure-JAX reference (matches PyTorch forward: sigmoid-do1, nobn=False, eval)
# ----------------------------------------------------------------------------
def fusion_reference(mem, vq, raw):
    def bn(x, s, b):
        return x * s[None, :, None, None] + b[None, :, None, None]

    def conv(x, w, b):
        y = jax.lax.conv_general_dilated(
            x, w, window_strides=(1, 1), padding="SAME",
            dimension_numbers=("NCHW", "OIHW", "NCHW"))
        return y + b[None, :, None, None]

    in1 = jnp.maximum(bn(vq, raw["bn1_scale"], raw["bn1_bias"]), 0.0)
    in2 = jnp.maximum(bn(mem, raw["bn2_scale"], raw["bn2_bias"]), 0.0)
    cat = jnp.concatenate([in1, in2], axis=1)
    out1 = conv(in1, raw["w1"], raw["b1"])
    out2 = conv(in2, raw["w2"], raw["b2"])
    att1 = conv(cat, raw["w3"], raw["b3"])
    att2 = conv(cat, raw["w4"], raw["b4"])
    fused = out1 * jax.nn.sigmoid(att1) + out2 * jax.nn.sigmoid(att2)
    fused = bn(fused, raw["bn_scale"], raw["bn_bias"])
    return jnp.maximum(fused, 0.0)


if __name__ == "__main__":
    key = jax.random.PRNGKey(0)
    N, C, H, W = 2, 4, 16, 16          # batch, stm_val_dim, spatial
    k_mem, k_vq, k_par = jax.random.split(key, 3)

    mem = jax.random.normal(k_mem, (N, C, H, W), dtype=jnp.float32)
    vq = jax.random.normal(k_vq, (N, C, H, W), dtype=jnp.float32)

    raw = make_params(k_par, C)
    kparams = pack_params(raw)

    out = fusion_forward(mem, vq, kparams)
    out = jax.block_until_ready(out)

    ref = fusion_reference(mem, vq, raw)
    np.testing.assert_allclose(np.asarray(out), np.asarray(ref),
                               rtol=5e-3, atol=5e-3)
    print("KERNEL_OK")
</pallas_src>

<mosaic_0001>
module attributes {stable_mosaic.version = 11 : i64} {
  func.func @kernel(%arg0: i32, %arg1: memref<1x4x256xf32, #tpu.memory_space<vmem>>, %arg2: memref<1x4x256xf32, #tpu.memory_space<vmem>>, %arg3: memref<32x73xf32, #tpu.memory_space<vmem>>, %arg4: memref<8x3xf32, #tpu.memory_space<vmem>>, %arg5: memref<9x256xf32, #tpu.memory_space<vmem>>, %arg6: memref<1x8x256xf32, #tpu.memory_space<vmem>>, %arg7: memref<73x256xf32, #tpu.memory_space<vmem>>) attributes {dimension_semantics = [#tpu.dimension_semantics<parallel>], iteration_bounds = array<i64: 2>, scalar_prefetch = 0 : i64, scratch_operands = 1 : i64, tpu.core_type = #tpu.core_type<tc>, window_params = [{transform_indices = @transform_0, window_bounds = array<i64: 1, 4, 256>}, {transform_indices = @transform_1, window_bounds = array<i64: 1, 4, 256>}, {pipeline_mode = #tpu.pipeline_mode<synchronous>, transform_indices = @transform_2, window_bounds = array<i64: 32, 73>}, {pipeline_mode = #tpu.pipeline_mode<synchronous>, transform_indices = @transform_3, window_bounds = array<i64: 8, 3>}, {pipeline_mode = #tpu.pipeline_mode<synchronous>, transform_indices = @transform_4, window_bounds = array<i64: 9, 256>}, {transform_indices = @transform_5, window_bounds = array<i64: 1, 8, 256>}]} {
    %c0 = arith.constant 0 : index
    %c0_0 = arith.constant 0 : index
    %0 = vector.load %arg4[%c0, %c0_0] : memref<8x3xf32, #tpu.memory_space<vmem>>, vector<8x1xf32>
    %c0_1 = arith.constant 0 : index
    %c1 = arith.constant 1 : index
    %1 = vector.load %arg4[%c0_1, %c1] : memref<8x3xf32, #tpu.memory_space<vmem>>, vector<8x1xf32>
    %c0_2 = arith.constant 0 : index
    %c2 = arith.constant 2 : index
    %2 = vector.load %arg4[%c0_2, %c2] : memref<8x3xf32, #tpu.memory_space<vmem>>, vector<8x1xf32>
    %c0_3 = arith.constant 0 : index
    %c0_4 = arith.constant 0 : index
    %c0_5 = arith.constant 0 : index
    %3 = vector.load %arg1[%c0_3, %c0_4, %c0_5] : memref<1x4x256xf32, #tpu.memory_space<vmem>>, vector<1x4x256xf32>
    %4 = vector.shape_cast %3 : vector<1x4x256xf32> to vector<4x256xf32>
    %c0_6 = arith.constant 0 : index
    %c0_7 = arith.constant 0 : index
    %c0_8 = arith.constant 0 : index
    %5 = vector.load %arg2[%c0_6, %c0_7, %c0_8] : memref<1x4x256xf32, #tpu.memory_space<vmem>>, vector<1x4x256xf32>
    %6 = vector.shape_cast %5 : vector<1x4x256xf32> to vector<4x256xf32>
    %7 = tpu.concatenate %4, %6 in 0 : vector<4x256xf32>, vector<4x256xf32> -> vector<8x256xf32>
    %8 = vector.broadcast %0 : vector<8x1xf32> to vector<8x256xf32>
    %9 = arith.mulf %7, %8 : vector<8x256xf32>
    %10 = vector.broadcast %1 : vector<8x1xf32> to vector<8x256xf32>
    %11 = arith.addf %9, %10 : vector<8x256xf32>
    %cst = arith.constant 0.000000e+00 : f32
    %12 = vector.broadcast %cst : f32 to vector<8x256xf32>
    %13 = arith.maximumf %11, %12 : vector<8x256xf32>
    %c17_i32 = arith.constant 17 : i32
    %14 = tpu.dynamic_rotate %13 by %c17_i32 dim 1 : vector<8x256xf32>, i32 -> vector<8x256xf32>
    %c0_9 = arith.constant 0 : index
    %c0_10 = arith.constant 0 : index
    %15 = vector.load %arg5[%c0_9, %c0_10] : memref<9x256xf32, #tpu.memory_space<vmem>>, vector<1x256xf32>
    %16 = vector.broadcast %15 : vector<1x256xf32> to vector<8x256xf32>
    %17 = arith.mulf %14, %16 : vector<8x256xf32>
    %c0_11 = arith.constant 0 : index
    %c0_12 = arith.constant 0 : index
    %18 = vector.load %arg7[%c0_11, %c0_12] : memref<73x256xf32, #tpu.memory_space<vmem>>, vector<8x256xf32>
    tpu.vector_store %arg7[%c0_11, %c0_12], %17 {strides = array<i32>} : memref<73x256xf32, #tpu.memory_space<vmem>>, vector<8x256xf32>,
    %c16_i32 = arith.constant 16 : i32
    %19 = tpu.dynamic_rotate %13 by %c16_i32 dim 1 : vector<8x256xf32>, i32 -> vector<8x256xf32>
    %c1_13 = arith.constant 1 : index
    %c0_14 = arith.constant 0 : index
    %20 = vector.load %arg5[%c1_13, %c0_14] : memref<9x256xf32, #tpu.memory_space<vmem>>, vector<1x256xf32>
    %21 = vector.broadcast %20 : vector<1x256xf32> to vector<8x256xf32>
    %22 = arith.mulf %19, %21 : vector<8x256xf32>
    %c8 = arith.constant 8 : index
    %c0_15 = arith.constant 0 : index
    %23 = vector.load %arg7[%c8, %c0_15] : memref<73x256xf32, #tpu.memory_space<vmem>>, vector<8x256xf32>
    tpu.vector_store %arg7[%c8, %c0_15], %22 {strides = array<i32>} : memref<73x256xf32, #tpu.memory_space<vmem>>, vector<8x256xf32>,
    %c15_i32 = arith.constant 15 : i32
    %24 = tpu.dynamic_rotate %13 by %c15_i32 dim 1 : vector<8x256xf32>, i32 -> vector<8x256xf32>
    %c2_16 = arith.constant 2 : index
    %c0_17 = arith.constant 0 : index
    %25 = vector.load %arg5[%c2_16, %c0_17] : memref<9x256xf32, #tpu.memory_space<vmem>>, vector<1x256xf32>
    %26 = vector.broadcast %25 : vector<1x256xf32> to vector<8x256xf32>
    %27 = arith.mulf %24, %26 : vector<8x256xf32>
    %c16 = arith.constant 16 : index
    %c0_18 = arith.constant 0 : index
    %28 = vector.load %arg7[%c16, %c0_18] : memref<73x256xf32, #tpu.memory_space<vmem>>, vector<8x256xf32>
    tpu.vector_store %arg7[%c16, %c0_18], %27 {strides = array<i32>} : memref<73x256xf32, #tpu.memory_space<vmem>>, vector<8x256xf32>,
    %c1_i32 = arith.constant 1 : i32
    %29 = tpu.dynamic_rotate %13 by %c1_i32 dim 1 : vector<8x256xf32>, i32 -> vector<8x256xf32>
    %c3 = arith.constant 3 : index
    %c0_19 = arith.constant 0 : index
    %30 = vector.load %arg5[%c3, %c0_19] : memref<9x256xf32, #tpu.memory_space<vmem>>, vector<1x256xf32>
    %31 = vector.broadcast %30 : vector<1x256xf32> to vector<8x256xf32>
    %32 = arith.mulf %29, %31 : vector<8x256xf32>
    %c24 = arith.constant 24 : index
    %c0_20 = arith.constant 0 : index
    %33 = vector.load %arg7[%c24, %c0_20] : memref<73x256xf32, #tpu.memory_space<vmem>>, vector<8x256xf32>
    tpu.vector_store %arg7[%c24, %c0_20], %32 {strides = array<i32>} : memref<73x256xf32, #tpu.memory_space<vmem>>, vector<8x256xf32>,
    %c32 = arith.constant 32 : index
    %c0_21 = arith.constant 0 : index
    %34 = vector.load %arg7[%c32, %c0_21] : memref<73x256xf32, #tpu.memory_space<vmem>>, vector<8x256xf32>
    tpu.vector_store %arg7[%c32, %c0_21], %13 {strides = array<i32>} : memref<73x256xf32, #tpu.memory_space<vmem>>, vector<8x256xf32>,
    %c255_i32 = arith.constant 255 : i32
    %35 = tpu.dynamic_rotate %13 by %c255_i32 dim 1 : vector<8x256xf32>, i32 -> vector<8x256xf32>
    %c5 = arith.constant 5 : index
    %c0_22 = arith.constant 0 : index
    %36 = vector.load %arg5[%c5, %c0_22] : memref<9x256xf32, #tpu.memory_space<vmem>>, vector<1x256xf32>
    %37 = vector.broadcast %36 : vector<1x256xf32> to vector<8x256xf32>
    %38 = arith.mulf %35, %37 : vector<8x256xf32>
    %c40 = arith.constant 40 : index
    %c0_23 = arith.constant 0 : index
    %39 = vector.load %arg7[%c40, %c0_23] : memref<73x256xf32, #tpu.memory_space<vmem>>, vector<8x256xf32>
    tpu.vector_store %arg7[%c40, %c0_23], %38 {strides = array<i32>} : memref<73x256xf32, #tpu.memory_space<vmem>>, vector<8x256xf32>,
    %c241_i32 = arith.constant 241 : i32
    %40 = tpu.dynamic_rotate %13 by %c241_i32 dim 1 : vector<8x256xf32>, i32 -> vector<8x256xf32>
    %c6 = arith.constant 6 : index
    %c0_24 = arith.constant 0 : index
    %41 = vector.load %arg5[%c6, %c0_24] : memref<9x256xf32, #tpu.memory_space<vmem>>, vector<1x256xf32>
    %42 = vector.broadcast %41 : vector<1x256xf32> to vector<8x256xf32>
    %43 = arith.mulf %40, %42 : vector<8x256xf32>
    %c48 = arith.constant 48 : index
    %c0_25 = arith.constant 0 : index
    %44 = vector.load %arg7[%c48, %c0_25] : memref<73x256xf32, #tpu.memory_space<vmem>>, vector<8x256xf32>
    tpu.vector_store %arg7[%c48, %c0_25], %43 {strides = array<i32>} : memref<73x256xf32, #tpu.memory_space<vmem>>, vector<8x256xf32>,
    %c240_i32 = arith.constant 240 : i32
    %45 = tpu.dynamic_rotate %13 by %c240_i32 dim 1 : vector<8x256xf32>, i32 -> vector<8x256xf32>
    %c7 = arith.constant 7 : index
    %c0_26 = arith.constant 0 : index
    %46 = vector.load %arg5[%c7, %c0_26] : memref<9x256xf32, #tpu.memory_space<vmem>>, vector<1x256xf32>
    %47 = vector.broadcast %46 : vector<1x256xf32> to vector<8x256xf32>
    %48 = arith.mulf %45, %47 : vector<8x256xf32>
    %c56 = arith.constant 56 : index
    %c0_27 = arith.constant 0 : index
    %49 = vector.load %arg7[%c56, %c0_27] : memref<73x256xf32, #tpu.memory_space<vmem>>, vector<8x256xf32>
    tpu.vector_store %arg7[%c56, %c0_27], %48 {strides = array<i32>} : memref<73x256xf32, #tpu.memory_space<vmem>>, vector<8x256xf32>,
    %c239_i32 = arith.constant 239 : i32
    %50 = tpu.dynamic_rotate %13 by %c239_i32 dim 1 : vector<8x256xf32>, i32 -> vector<8x256xf32>
    %c8_28 = arith.constant 8 : index
    %c0_29 = arith.constant 0 : index
    %51 = vector.load %arg5[%c8_28, %c0_29] : memref<9x256xf32, #tpu.memory_space<vmem>>, vector<1x256xf32>
    %52 = vector.broadcast %51 : vector<1x256xf32> to vector<8x256xf32>
    %53 = arith.mulf %50, %52 : vector<8x256xf32>
    %c64 = arith.constant 64 : index
    %c0_30 = arith.constant 0 : index
    %54 = vector.load %arg7[%c64, %c0_30] : memref<73x256xf32, #tpu.memory_space<vmem>>, vector<8x256xf32>
    tpu.vector_store %arg7[%c64, %c0_30], %53 {strides = array<i32>} : memref<73x256xf32, #tpu.memory_space<vmem>>, vector<8x256xf32>,
    %cst_31 = arith.constant 1.000000e+00 : f32
    %55 = vector.broadcast %cst_31 : f32 to vector<1x256xf32>
    %c72 = arith.constant 72 : index
    %c0_32 = arith.constant 0 : index
    %56 = vector.load %arg7[%c72, %c0_32] : memref<73x256xf32, #tpu.memory_space<vmem>>, vector<1x256xf32>
    tpu.vector_store %arg7[%c72, %c0_32], %55 {strides = array<i32>} : memref<73x256xf32, #tpu.memory_space<vmem>>, vector<1x256xf32>,
    %c0_33 = arith.constant 0 : index
    %c0_34 = arith.constant 0 : index
    %57 = vector.load %arg3[%c0_33, %c0_34] : memref<32x73xf32, #tpu.memory_space<vmem>>, vector<32x73xf32>
    %c0_35 = arith.constant 0 : index
    %c0_36 = arith.constant 0 : index
    %58 = vector.load %arg7[%c0_35, %c0_36] : memref<73x256xf32, #tpu.memory_space<vmem>>, vector<73x256xf32>
    %cst_37 = arith.constant dense<0.000000e+00> : vector<32x256xf32>
    %59 = tpu.matmul %57, %58, %cst_37 {dimension_numbers = #tpu.dot_dimension_numbers<[1], [0], [0], [1], [0, 0, 1, 1], [], []>} : vector<32x73xf32>, vector<73x256xf32>, vector<32x256xf32> -> vector<32x256xf32>
    %60 = vector.extract_strided_slice %59 {offsets = [0, 0], sizes = [8, 256], strides = [1, 1]} : vector<32x256xf32> to vector<8x256xf32>
    %61 = vector.extract_strided_slice %59 {offsets = [8, 0], sizes = [8, 256], strides = [1, 1]} : vector<32x256xf32> to vector<8x256xf32>
    %62 = vector.extract_strided_slice %59 {offsets = [16, 0], sizes = [8, 256], strides = [1, 1]} : vector<32x256xf32> to vector<8x256xf32>
    %63 = vector.extract_strided_slice %59 {offsets = [24, 0], sizes = [8, 256], strides = [1, 1]} : vector<32x256xf32> to vector<8x256xf32>
    %cst_38 = arith.constant 0.000000e+00 : f32
    %64 = vector.broadcast %cst_38 : f32 to vector<8x256xf32>
    %65 = arith.subf %64, %62 : vector<8x256xf32>
    %66 = math.exp %65 : vector<8x256xf32>
    %cst_39 = arith.constant 1.000000e+00 : f32
    %67 = vector.broadcast %cst_39 : f32 to vector<8x256xf32>
    %68 = arith.addf %67, %66 : vector<8x256xf32>
    %69 = tpu.reciprocal %68 {approx = true} : vector<8x256xf32> -> vector<8x256xf32>
    %cst_40 = arith.constant 0.000000e+00 : f32
    %70 = vector.broadcast %cst_40 : f32 to vector<8x256xf32>
    %71 = arith.subf %70, %63 : vector<8x256xf32>
    %72 = math.exp %71 : vector<8x256xf32>
    %cst_41 = arith.constant 1.000000e+00 : f32
    %73 = vector.broadcast %cst_41 : f32 to vector<8x256xf32>
    %74 = arith.addf %73, %72 : vector<8x256xf32>
    %75 = tpu.reciprocal %74 {approx = true} : vector<8x256xf32> -> vector<8x256xf32>
    %76 = arith.mulf %60, %69 : vector<8x256xf32>
    %77 = arith.mulf %61, %75 : vector<8x256xf32>
    %78 = arith.addf %76, %77 : vector<8x256xf32>
    %79 = vector.broadcast %2 : vector<8x1xf32> to vector<8x256xf32>
    %80 = arith.addf %78, %79 : vector<8x256xf32>
    %cst_42 = arith.constant 0.000000e+00 : f32
    %81 = vector.broadcast %cst_42 : f32 to vector<8x256xf32>
    %82 = arith.maximumf %80, %81 : vector<8x256xf32>
    %c0_43 = arith.constant 0 : index
    %c0_44 = arith.constant 0 : index
    %c0_45 = arith.constant 0 : index
    %83 = vector.load %arg6[%c0_43, %c0_44, %c0_45] : memref<1x8x256xf32, #tpu.memory_space<vmem>>, vector<1x8x256xf32>
    %84 = vector.shape_cast %83 : vector<1x8x256xf32> to vector<8x256xf32>
    %85 = vector.shape_cast %82 : vector<8x256xf32> to vector<1x8x256xf32>
    tpu.vector_store %arg6[%c0_43, %c0_44, %c0_45], %85 {strides = array<i32>} : memref<1x8x256xf32, #tpu.memory_space<vmem>>, vector<1x8x256xf32>,
    return
  }
  func.func @transform_0(%arg0: i32) -> (i32, i32, i32) {
    %c0_i32 = arith.constant 0 : i32
    %c0_i32_0 = arith.constant 0 : i32
    %c0_i32_1 = arith.constant 0 : i32
    return %arg0, %c0_i32, %c0_i32_0 : i32, i32, i32
  }
  func.func @transform_1(%arg0: i32) -> (i32, i32, i32) {
    %c0_i32 = arith.constant 0 : i32
    %c0_i32_0 = arith.constant 0 : i32
    %c0_i32_1 = arith.constant 0 : i32
    return %arg0, %c0_i32, %c0_i32_0 : i32, i32, i32
  }
  func.func @transform_2(%arg0: i32) -> (i32, i32) {
    %c0_i32 = arith.constant 0 : i32
    %c0_i32_0 = arith.constant 0 : i32
    %c0_i32_1 = arith.constant 0 : i32
    return %c0_i32, %c0_i32_0 : i32, i32
  }
  func.func @transform_3(%arg0: i32) -> (i32, i32) {
    %c0_i32 = arith.constant 0 : i32
    %c0_i32_0 = arith.constant 0 : i32
    %c0_i32_1 = arith.constant 0 : i32
    return %c0_i32, %c0_i32_0 : i32, i32
  }
  func.func @transform_4(%arg0: i32) -> (i32, i32) {
    %c0_i32 = arith.constant 0 : i32
    %c0_i32_0 = arith.constant 0 : i32
    %c0_i32_1 = arith.constant 0 : i32
    return %c0_i32, %c0_i32_0 : i32, i32
  }
  func.func @transform_5(%arg0: i32) -> (i32, i32, i32) {
    %c0_i32 = arith.constant 0 : i32
    %c0_i32_0 = arith.constant 0 : i32
    %c0_i32_1 = arith.constant 0 : i32
    return %arg0, %c0_i32, %c0_i32_0 : i32, i32, i32
  }
}

</mosaic_0001>

<llo_original>
// kernel: tpu_custom_call.1
$region0: #{tpu_custom_call.1}
  #allocation0 [shape = 'u32[]', space=smem, size = 0x4, offset = 0x4, fixed_abs, tag = 'smem constant byte address 0x4 - core index']
  #allocation1 [shape = 'u32[144,128]{1,0:T(1,128)}', space=vmem, size = 0x12000, scoped, tag = 'internal scratch']
  #allocation2 [shape = 'f32[73,256]{1,0:T(8,128)}', space=vmem, size = 0x14000, scoped, tag = 'scratch operand']
  %s0 = inlined_call_operand.hbm [shape: f32[2,4,256], index: 0, kind: input, shape index: {}]
  %s1 = inlined_call_operand.hbm [shape: f32[2,4,256], index: 1, kind: input, shape index: {}]
  %s2 = inlined_call_operand.hbm [shape: f32[32,73], index: 2, kind: input, shape index: {}]
  %s3 = inlined_call_operand.vmem [shape: f32[8,3], index: 3, kind: input, shape index: {}]
  %s4 = inlined_call_operand.hbm [shape: f32[9,256], index: 4, kind: input, shape index: {}]
  %s5 = inlined_call_operand.hbm [shape: f32[2,8,256], index: 5, kind: output, shape index: {}]
  %s6 = sld [smem:[#allocation0]]
  $region69: #{tpu_custom_call.1} parent=0
    _
  %s8 = ssub.s32 1, %s6
  %s9 = scalar_select 0, %s8, %s6
  $region1: #{tpu_custom_call.1} parent=0
    #allocation3 [shape = 'u8[8192]{0}', space=vmem, size = 0x2000, scoped, tag = 'input window, operand 0']
    #allocation4 [shape = 's32[2]{0}', space=sflag, size = 0x8, scoped, tag = 'scoped memory for tpu_custom_call.1']
    #allocation5 [shape = 's32[2]{0}', space=sflag, size = 0x8, scoped, tag = 'scoped memory for tpu_custom_call.1']
    #allocation6 [shape = 'u8[8192]{0}', space=vmem, size = 0x2000, scoped, tag = 'input window, operand 1']
    #allocation7 [shape = 's32[2]{0}', space=sflag, size = 0x8, scoped, tag = 'scoped memory for tpu_custom_call.1']
    #allocation8 [shape = 'u8[16384]{0}', space=vmem, size = 0x4000, scoped, tag = 'input window, operand 2, single buffered']
    #allocation9 [shape = 'u8[16384]{0}', space=vmem, size = 0x4000, scoped, tag = 'input window, operand 4, single buffered']
    #allocation10 [shape = 's32[1]{0}', space=sflag, size = 0x4, scoped, tag = 'scoped memory for tpu_custom_call.1']
    #allocation11 [shape = 'u8[16384]{0}', space=vmem, size = 0x4000, scoped, tag = 'output window, operand 0']
    %10 = vsyncpa [#allocation4], 0
    %s11 = scalar_lea.sflag [#allocation4], 1
    %12 = vsyncpa %s11, 0
    %13 = vsyncpa [#allocation7], 0
    %s14 = scalar_lea.sflag [#allocation7], 1
    %15 = vsyncpa %s14, 0
    %16 = vsyncpa [#allocation10], 0
    %17 = vsyncpa [#allocation5], 0
    %s18 = scalar_lea.sflag [#allocation5], 1
    %19 = vsyncpa %s18, 0
    loop: start=0, step=1, limit=4
    $region2: #{tpu_custom_call.1} parent=1 // loop_pre_header
      _
    $region3: #{tpu_custom_call.1} parent=1 // loop_header
      %s21 = sphi 0, %s25
      %p22 = scmp.ge.s32.totalorder %s21, 4
      %s31 = sphi 0, %s33
      %s34 = sphi 0, %s31
      %s35 = sphi 0, %s34
      %s51 = sphi 0, %s35
      %s57 = sphi 0, %s59
      %s60 = sphi 0, %s57
      %s61 = sphi 0, %s60
      %s77 = sphi 0, %s61
      %s81 = sphi 0, %s81
      %s83 = sphi 0, %s81
      %s84 = sphi 0, %s83
      %s98 = sphi 0, %s84
      %s102 = sphi 0, %s102
      %s104 = sphi 0, %s102
      %s105 = sphi 0, %s104
      %s119 = sphi 0, %s105
      %s123 = sphi 0, %s123
      %s125 = sphi 0, %s123
      %s126 = sphi 0, %s125
      %s140 = sphi 0, %s126
      %s146 = sphi 0, %s148
      %s149 = sphi 0, %s146
      %s150 = sphi 0, %s149
      %s166 = sphi 0, %s150
    $region4: #{tpu_custom_call.1} parent=1 // loop_header_branch
      %24 = sbr.rel (%p22) target = $region8
    $region5: #{tpu_custom_call.1} parent=1 // loop_body
      %s26 = ssub.s32 %s21, 1
      %s27 = ssub.s32 %s21, 2
      %s28 = sadd.s32 %s21, 1
      %s29 = ssub.s32 %s21, %s28
      %p30 = scmp.eq.s32.totalorder %s29, 0
      %s32 = sadd.s32 %s31, 1
      %s33 = scalar_select %p30, %s31, %s32
      %p36 = pneg %p30
      %p37 = scmp.eq.s32.totalorder %s21, 1
      %p38 = por %p36, %p37
      %p39 = scmp.ne.s32.totalorder %s31, %s34
      %p40 = scmp.eq.s32.totalorder %s21, 0
      %p41 = por %p39, %p40
      %p42 = scmp.ne.s32.totalorder %s31, %s34
      %p43 = scmp.eq.s32.totalorder %s26, 1
      %p44 = por %p42, %p43
      %p45 = scmp.ne.s32.totalorder %s34, %s35
      %p46 = scmp.eq.s32.totalorder %s26, 0
      %p47 = por %p45, %p46
      %p48 = scmp.ne.s32.totalorder %s34, %s35
      %p49 = scmp.eq.s32.totalorder %s27, 1
      %p50 = por %p48, %p49
      %p52 = scmp.ne.s32.totalorder %s35, %s51
      %p53 = scmp.eq.s32.totalorder %s27, 0
      %p54 = por %p52, %p53
      %s55 = ssub.s32 %s21, %s28
      %p56 = scmp.eq.s32.totalorder %s55, 0
      %s58 = sadd.s32 %s57, 1
      %s59 = scalar_select %p56, %s57, %s58
      %p62 = pneg %p56
      %p63 = scmp.eq.s32.totalorder %s21, 1
      %p64 = por %p62, %p63
      %p65 = scmp.ne.s32.totalorder %s57, %s60
      %p66 = scmp.eq.s32.totalorder %s21, 0
      %p67 = por %p65, %p66
      %p68 = scmp.ne.s32.totalorder %s57, %s60
      %p69 = scmp.eq.s32.totalorder %s26, 1
      %p70 = por %p68, %p69
      %p71 = scmp.ne.s32.totalorder %s60, %s61
      %p72 = scmp.eq.s32.totalorder %s26, 0
      %p73 = por %p71, %p72
      %p74 = scmp.ne.s32.totalorder %s60, %s61
      %p75 = scmp.eq.s32.totalorder %s27, 1
      %p76 = por %p74, %p75
      %p78 = scmp.ne.s32.totalorder %s61, %s77
      %p79 = scmp.eq.s32.totalorder %s27, 0
      %p80 = por %p78, %p79
      %s82 = sadd.s32 %s81, 1
      %p85 = scmp.eq.s32.totalorder %s21, 1
      %p86 = scmp.ne.s32.totalorder %s81, %s83
      %p87 = scmp.eq.s32.totalorder %s21, 0
      %p88 = por %p86, %p87
      %p89 = scmp.ne.s32.totalorder %s81, %s83
      %p90 = scmp.eq.s32.totalorder %s26, 1
      %p91 = por %p89, %p90
      %p92 = scmp.ne.s32.totalorder %s83, %s84
      %p93 = scmp.eq.s32.totalorder %s26, 0
      %p94 = por %p92, %p93
      %p95 = scmp.ne.s32.totalorder %s83, %s84
      %p96 = scmp.eq.s32.totalorder %s27, 1
      %p97 = por %p95, %p96
      %p99 = scmp.ne.s32.totalorder %s84, %s98
      %p100 = scmp.eq.s32.totalorder %s27, 0
      %p101 = por %p99, %p100
      %s103 = sadd.s32 %s102, 1
      %p106 = scmp.eq.s32.totalorder %s21, 1
      %p107 = scmp.ne.s32.totalorder %s102, %s104
      %p108 = scmp.eq.s32.totalorder %s21, 0
      %p109 = por %p107, %p108
      %p110 = scmp.ne.s32.totalorder %s102, %s104
      %p111 = scmp.eq.s32.totalorder %s26, 1
      %p112 = por %p110, %p111
      %p113 = scmp.ne.s32.totalorder %s104, %s105
      %p114 = scmp.eq.s32.totalorder %s26, 0
      %p115 = por %p113, %p114
      %p116 = scmp.ne.s32.totalorder %s104, %s105
      %p117 = scmp.eq.s32.totalorder %s27, 1
      %p118 = por %p116, %p117
      %p120 = scmp.ne.s32.totalorder %s105, %s119
      %p121 = scmp.eq.s32.totalorder %s27, 0
      %p122 = por %p120, %p121
      %s124 = sadd.s32 %s123, 1
      %p127 = scmp.eq.s32.totalorder %s21, 1
      %p128 = scmp.ne.s32.totalorder %s123, %s125
      %p129 = scmp.eq.s32.totalorder %s21, 0
      %p130 = por %p128, %p129
      %p131 = scmp.ne.s32.totalorder %s123, %s125
      %p132 = scmp.eq.s32.totalorder %s26, 1
      %p133 = por %p131, %p132
      %p134 = scmp.ne.s32.totalorder %s125, %s126
      %p135 = scmp.eq.s32.totalorder %s26, 0
      %p136 = por %p134, %p135
      %p137 = scmp.ne.s32.totalorder %s125, %s126
      %p138 = scmp.eq.s32.totalorder %s27, 1
      %p139 = por %p137, %p138
      %p141 = scmp.ne.s32.totalorder %s126, %s140
      %p142 = scmp.eq.s32.totalorder %s27, 0
      %p143 = por %p141, %p142
      %s144 = ssub.s32 %s21, %s28
      %p145 = scmp.eq.s32.totalorder %s144, 0
      %s147 = sadd.s32 %s146, 1
      %s148 = scalar_select %p145, %s146, %s147
      %p151 = pneg %p145
      %p152 = scmp.eq.s32.totalorder %s21, 1
      %p153 = por %p151, %p152
      %p154 = scmp.ne.s32.totalorder %s146, %s149
      %p155 = scmp.eq.s32.totalorder %s21, 0
      %p156 = por %p154, %p155
      %p157 = scmp.ne.s32.totalorder %s146, %s149
      %p158 = scmp.eq.s32.totalorder %s26, 1
      %p159 = por %p157, %p158
      %p160 = scmp.ne.s32.totalorder %s149, %s150
      %p161 = scmp.eq.s32.totalorder %s26, 0
      %p162 = por %p160, %p161
      %p163 = scmp.ne.s32.totalorder %s149, %s150
      %p164 = scmp.eq.s32.totalorder %s27, 1
      %p165 = por %p163, %p164
      %p167 = scmp.ne.s32.totalorder %s150, %s166
      %p168 = scmp.eq.s32.totalorder %s27, 0
      %p169 = por %p167, %p168
      %p170 = scmp.le.s32.totalorder 1, %s21
      %p171 = scmp.lt.s32.totalorder %s21, 3
      %p172 = pnand %p170, %p171
      %p173 = pneg %p172
      // Predicated region
      $region9: #{tpu_custom_call.1} parent=5 // pred_check
        _
      $region10: #{tpu_custom_call.1} parent=5 // pred_check_branch
        %175 = sbr.rel (%p172) target = $region12
      $region11: #{tpu_custom_call.1} parent=5 // pred_region
        %s176 = ssub.s32 %s21, 1
        // Predicated region
        $region13: #{tpu_custom_call.1} parent=11 // pred_check
          %p177 = pneg %p94
        $region14: #{tpu_custom_call.1} parent=11 // pred_check_branch
          %179 = sbr.rel (%p177) target = $region16
        $region15: #{tpu_custom_call.1} parent=11 // pred_region
          %s181 = ssub.s32 512, 512
          %182 = vsyncadd [#allocation7], %s181
          %s183 = sshll.u32 [#allocation8], 4
          %s184 = int_to_ptr.vmem [resolvable:$true] %s183
          %189 = dma.hbm_to_vmem [thread:$0]  %s2, 512, %s184, [#allocation7], 128, 128, 8
        $region16: #{tpu_custom_call.1} parent=11 // pred_fallthru
          _
        // Predicated region
        $region17: #{tpu_custom_call.1} parent=11 // pred_check
          %p190 = pneg %p115
        $region18: #{tpu_custom_call.1} parent=11 // pred_check_branch
          %192 = sbr.rel (%p190) target = $region20
        $region19: #{tpu_custom_call.1} parent=11 // pred_region
          _
        $region20: #{tpu_custom_call.1} parent=11 // pred_fallthru
          _
        // Predicated region
        $region21: #{tpu_custom_call.1} parent=11 // pred_check
          %p193 = pneg %p136
        $region22: #{tpu_custom_call.1} parent=11 // pred_check_branch
          %195 = sbr.rel (%p193) target = $region24
        $region23: #{tpu_custom_call.1} parent=11 // pred_region
          %s197 = ssub.s32 512, 512
          %198 = vsyncadd [#allocation10], %s197
          %s199 = sshll.u32 [#allocation9], 4
          %s200 = int_to_ptr.vmem [resolvable:$true] %s199
          %205 = dma.hbm_to_vmem [thread:$0]  %s4, 512, %s200, [#allocation10], 256, 256, 16
        $region24: #{tpu_custom_call.1} parent=11 // pred_fallthru
          _
      $region12: #{tpu_custom_call.1} parent=5 // pred_fallthru
        _
      %p206 = scmp.lt.s32.totalorder %s21, 2
      // Predicated region
      $region25: #{tpu_custom_call.1} parent=5 // pred_check
        %p207 = pneg %p206
      $region26: #{tpu_custom_call.1} parent=5 // pred_check_branch
        %209 = sbr.rel (%p207) target = $region28
      $region27: #{tpu_custom_call.1} parent=5 // pred_region
        // Predicated region
        $region29: #{tpu_custom_call.1} parent=27 // pred_check
          %p210 = pneg %p41
        $region30: #{tpu_custom_call.1} parent=27 // pred_check_branch
          %212 = sbr.rel (%p210) target = $region32
        $region31: #{tpu_custom_call.1} parent=27 // pred_region
          %s213 = sand.u32 %s31, 1
          %s214 = scalar_lea.sflag [#allocation4], %s213
          %s215 = sand.u32 %s31, 1
          %s216 = smul.addr %s215, 8
          %s217 = scalar_lea.vmem [#allocation3], %s216
          %s219 = ssub.s32 128, 128
          %220 = vsyncadd %s214, %s219
          %s221 = smul.addr %s21, 2
          %s222 = smul.addr %s221, 64
          %s223 = scalar_lea.hbm %s0, %s222
          %s225 = sshll.u32 %s217, 4
          %s226 = int_to_ptr.vmem [resolvable:$true] %s225
          %228 = dma.hbm_to_vmem [thread:$0]  %s223, 128, %s226, %s214
        $region32: #{tpu_custom_call.1} parent=27 // pred_fallthru
          _
        // Predicated region
        $region33: #{tpu_custom_call.1} parent=27 // pred_check
          %p229 = pneg %p67
        $region34: #{tpu_custom_call.1} parent=27 // pred_check_branch
          %231 = sbr.rel (%p229) target = $region36
        $region35: #{tpu_custom_call.1} parent=27 // pred_region
          %s232 = sand.u32 %s21, 1
          %s233 = scalar_lea.sflag [#allocation7], %s232
          %s234 = sand.u32 %s57, 1
          %s235 = smul.addr %s234, 8
          %s236 = scalar_lea.vmem [#allocation6], %s235
          %s238 = ssub.s32 128, 128
          %239 = vsyncadd %s233, %s238
          %s240 = smul.addr %s21, 2
          %s241 = smul.addr %s240, 64
          %s242 = scalar_lea.hbm %s1, %s241
          %s244 = sshll.u32 %s236, 4
          %s245 = int_to_ptr.vmem [resolvable:$true] %s244
          %247 = dma.hbm_to_vmem [thread:$0]  %s242, 128, %s245, %s233
        $region36: #{tpu_custom_call.1} parent=27 // pred_fallthru
          _
      $region28: #{tpu_custom_call.1} parent=5 // pred_fallthru
        _
      %p248 = scmp.le.s32.totalorder 1, %s21
      %p249 = scmp.lt.s32.totalorder %s21, 3
      %p250 = pnand %p248, %p249
      %p251 = pneg %p250
      // Predicated region
      $region37: #{tpu_custom_call.1} parent=5 // pred_check
        _
      $region38: #{tpu_custom_call.1} parent=5 // pred_check_branch
        %253 = sbr.rel (%p250) target = $region40
      $region39: #{tpu_custom_call.1} parent=5 // pred_region
        %s254 = ssub.s32 %s21, 1
        %s255 = sand.u32 %s34, 1
        %s256 = scalar_lea.sflag [#allocation4], %s255
        %s257 = sand.u32 %s34, 1
        %s258 = smul.addr %s257, 8
        %s259 = scalar_lea.vmem [#allocation3], %s258
        // Predicated region
        $region41: #{tpu_custom_call.1} parent=39 // pred_check
          %p260 = pneg %p47
        $region42: #{tpu_custom_call.1} parent=39 // pred_check_branch
          %262 = sbr.rel (%p260) target = $region44
        $region43: #{tpu_custom_call.1} parent=39 // pred_region
          %263 = dma.done %s256, 128
        $region44: #{tpu_custom_call.1} parent=39 // pred_fallthru
          _
        %s264 = sand.u32 %s26, 1
        %s265 = scalar_lea.sflag [#allocation7], %s264
        %s266 = sand.u32 %s60, 1
        %s267 = smul.addr %s266, 8
        %s268 = scalar_lea.vmem [#allocation6], %s267
        // Predicated region
        $region45: #{tpu_custom_call.1} parent=39 // pred_check
          %p269 = pneg %p73
        $region46: #{tpu_custom_call.1} parent=39 // pred_check_branch
          %271 = sbr.rel (%p269) target = $region48
        $region47: #{tpu_custom_call.1} parent=39 // pred_region
          %272 = dma.done %s265, 128
        $region48: #{tpu_custom_call.1} parent=39 // pred_fallthru
          _
        // Predicated region
        $region49: #{tpu_custom_call.1} parent=39 // pred_check
          %p273 = pneg %p94
        $region50: #{tpu_custom_call.1} parent=39 // pred_check_branch
          %275 = sbr.rel (%p273) target = $region52
        $region51: #{tpu_custom_call.1} parent=39 // pred_region
          %276 = dma.done [#allocation7], 512
        $region52: #{tpu_custom_call.1} parent=39 // pred_fallthru
          _
        // Predicated region
        $region53: #{tpu_custom_call.1} parent=39 // pred_check
          %p277 = pneg %p136
        $region54: #{tpu_custom_call.1} parent=39 // pred_check_branch
          %279 = sbr.rel (%p277) target = $region56
        $region55: #{tpu_custom_call.1} parent=39 // pred_region
          %280 = dma.done [#allocation10], 512
        $region56: #{tpu_custom_call.1} parent=39 // pred_fallthru
          _
        %s281 = sand.u32 %s34, 1
        %s282 = scalar_lea.sflag [#allocation4], %s281
        %s283 = sand.u32 %s34, 1
        %s284 = smul.addr %s283, 8
        %s285 = scalar_lea.vmem [#allocation3], %s284
        %p286 = pneg %p47
        %p287 = pneg %p44
        %s288 = sand.u32 %s26, 1
        %s289 = scalar_lea.sflag [#allocation7], %s288
        %s290 = sand.u32 %s60, 1
        %s291 = smul.addr %s290, 8
        %s292 = scalar_lea.vmem [#allocation6], %s291
        %p293 = pneg %p73
        %p294 = pneg %p70
        %p295 = pneg %p94
        %p296 = pneg %p91
        %p297 = pneg %p115
        %p298 = pneg %p112
        %p299 = pneg %p136
        %p300 = pneg %p133
        %p301 = pneg %p162
        %p302 = pneg %p159
        %s303 = sand.u32 %s149, 1
        %s304 = scalar_lea.sflag [#allocation5], %s303
        %s305 = sand.u32 %s149, 1
        %s306 = smul.addr %s305, 16
        %s307 = scalar_lea.vmem [#allocation11], %s306
        %v308 = vld [vmem:[%s3] sm:$0xff]
        %v309 = vld [vmem:[%s259] sm:$0xff]
        %v310 = vld [vmem:[%s268] sm:$0xff]
        %v312 = vcombine.high %v309, %v309
        %v315 = vcombine.low %v310, %v310
        %vm317 = vcmask 1043456
        %v318 = vsel %vm317, %v309, %v315
        %v319 = vsel %vm317, %v312, %v310
        %321 = vset.pattern.permute.xlu0 0
        %322 = vperm.xlu0 %321, %v308
        %v323 = vpop.permute.xlu0 %322
        %v325 = vmul.f32 %v318, %v323
        %v326 = vmul.f32 %v319, %v323
        %327 = vset.pattern.permute.xlu0 1
        %328 = vperm.xlu0 %327, %v308
        %v329 = vpop.permute.xlu0 %328
        %v331 = vadd.f32 %v325, %v329
        %v332 = vadd.f32 %v326, %v329
        %v333 = vmax.f32 %v331, 0.0
        %v334 = vmax.f32 %v332, 0.0
        %335 = vrot.lane.b32.xlu0 %v333, 17
        %v336 = vpop.permute.xlu0 %335
        %337 = vrot.lane.b32.xlu0 %v334, 17
        %v338 = vpop.permute.xlu0 %337
        %v339 = vlaneseq
        %v340 = vand.u32 %v339, 127
        %vm341 = vcmp.lt.s32.totalorder %v340, 17
        %v342 = vsel %vm341, %v336, %v338
        %v343 = vsel %vm341, %v338, %v336
        %v344 = vld [vmem:[#allocation9] ss:$8 sm:$0x3]
        %v346 = vlaneseq
        %v347 = vshrl.u32 %v346, 7
        %v348 = vsub.s32 0, %v347
        %v349 = vrot.slane %v344, %v348
        %v350 = vlaneseq
        %v351 = vshrl.u32 %v350, 7
        %v352 = vsub.s32 1, %v351
        %v353 = vrot.slane %v344, %v352
        %v356 = vmul.f32 %v343, %v349
        %v357 = vmul.f32 %v342, %v353
        %358 = vst [vmem:[#allocation2] sm:$0xff] %v356
        %359 = vst [vmem:[#allocation2 + $0x8] sm:$0xff] %v357
        %360 = vrot.lane.b32.xlu0 %v333, 16
        %v361 = vpop.permute.xlu0 %360
        %362 = vrot.lane.b32.xlu0 %v334, 16
        %v363 = vpop.permute.xlu0 %362
        %vm364 = vcmp.lt.s32.totalorder %v340, 16
        %v365 = vsel %vm364, %v361, %v363
        %v366 = vsel %vm364, %v363, %v361
        %s367 = scalar_lea.vmem [#allocation9], 1
        %v368 = vld [vmem:[%s367] ss:$8 sm:$0x3]
        %v370 = vlaneseq
        %v371 = vshrl.u32 %v370, 7
        %v372 = vsub.s32 0, %v371
        %v373 = vrot.slane %v368, %v372
        %v374 = vlaneseq
        %v375 = vshrl.u32 %v374, 7
        %v376 = vsub.s32 1, %v375
        %v377 = vrot.slane %v368, %v376
        %v380 = vmul.f32 %v366, %v373
        %v381 = vmul.f32 %v365, %v377
        %382 = vst [vmem:[#allocation2 + $0x10] sm:$0xff] %v380
        %383 = vst [vmem:[#allocation2 + $0x18] sm:$0xff] %v381
        %384 = vrot.lane.b32.xlu0 %v333, 15
        %v385 = vpop.permute.xlu0 %384
        %386 = vrot.lane.b32.xlu0 %v334, 15
        %v387 = vpop.permute.xlu0 %386
        %vm388 = vcmp.lt.s32.totalorder %v340, 15
        %v389 = vsel %vm388, %v385, %v387
        %v390 = vsel %vm388, %v387, %v385
        %s391 = scalar_lea.vmem [#allocation9], 2
        %v392 = vld [vmem:[%s391] ss:$8 sm:$0x3]
        %v394 = vlaneseq
        %v395 = vshrl.u32 %v394, 7
        %v396 = vsub.s32 0, %v395
        %v397 = vrot.slane %v392, %v396
        %v398 = vlaneseq
        %v399 = vshrl.u32 %v398, 7
        %v400 = vsub.s32 1, %v399
        %v401 = vrot.slane %v392, %v400
        %v404 = vmul.f32 %v390, %v397
        %v405 = vmul.f32 %v389, %v401
        %406 = vst [vmem:[#allocation2 + $0x20] sm:$0xff] %v404
        %407 = vst [vmem:[#allocation2 + $0x28] sm:$0xff] %v405
        %408 = vrot.lane.b32.xlu0 %v333, 1
        %v409 = vpop.permute.xlu0 %408
        %410 = vrot.lane.b32.xlu0 %v334, 1
        %v411 = vpop.permute.xlu0 %410
        %vm412 = vcmp.lt.s32.totalorder %v340, 1
        %v413 = vsel %vm412, %v409, %v411
        %v414 = vsel %vm412, %v411, %v409
        %s415 = scalar_lea.vmem [#allocation9], 3
        %v416 = vld [vmem:[%s415] ss:$8 sm:$0x3]
        %v418 = vlaneseq
        %v419 = vshrl.u32 %v418, 7
        %v420 = vsub.s32 0, %v419
        %v421 = vrot.slane %v416, %v420
        %v422 = vlaneseq
        %v423 = vshrl.u32 %v422, 7
        %v424 = vsub.s32 1, %v423
        %v425 = vrot.slane %v416, %v424
        %v428 = vmul.f32 %v414, %v421
        %v429 = vmul.f32 %v413, %v425
        %430 = vst [vmem:[#allocation2 + $0x30] sm:$0xff] %v428
        %431 = vst [vmem:[#allocation2 + $0x38] sm:$0xff] %v429
        %432 = vst [vmem:[#allocation2 + $0x40] sm:$0xff] %v333
        %433 = vst [vmem:[#allocation2 + $0x48] sm:$0xff] %v334
        %434 = vrot.lane.b32.xlu0 %v333, 127
        %v435 = vpop.permute.xlu0 %434
        %436 = vrot.lane.b32.xlu0 %v334, 127
        %v437 = vpop.permute.xlu0 %436
        %vm438 = vcmp.lt.s32.totalorder %v340, 127
        %v439 = vsel %vm438, %v435, %v437
        %v440 = vsel %vm438, %v437, %v435
        %s441 = scalar_lea.vmem [#allocation9], 5
        %v442 = vld [vmem:[%s441] ss:$8 sm:$0x3]
        %v444 = vlaneseq
        %v445 = vshrl.u32 %v444, 7
        %v446 = vsub.s32 0, %v445
        %v447 = vrot.slane %v442, %v446
        %v448 = vlaneseq
        %v449 = vshrl.u32 %v448, 7
        %v450 = vsub.s32 1, %v449
        %v451 = vrot.slane %v442, %v450
        %v454 = vmul.f32 %v439, %v447
        %v455 = vmul.f32 %v440, %v451
        %456 = vst [vmem:[#allocation2 + $0x50] sm:$0xff] %v454
        %457 = vst [vmem:[#allocation2 + $0x58] sm:$0xff] %v455
        %458 = vrot.lane.b32.xlu0 %v333, 113
        %v459 = vpop.permute.xlu0 %458
        %460 = vrot.lane.b32.xlu0 %v334, 113
        %v461 = vpop.permute.xlu0 %460
        %vm462 = vcmp.lt.s32.totalorder %v340, 113
        %v463 = vsel %vm462, %v459, %v461
        %v464 = vsel %vm462, %v461, %v459
        %s465 = scalar_lea.vmem [#allocation9], 6
        %v466 = vld [vmem:[%s465] ss:$8 sm:$0x3]
        %v468 = vlaneseq
        %v469 = vshrl.u32 %v468, 7
        %v470 = vsub.s32 0, %v469
        %v471 = vrot.slane %v466, %v470
        %v472 = vlaneseq
        %v473 = vshrl.u32 %v472, 7
        %v474 = vsub.s32 1, %v473
        %v475 = vrot.slane %v466, %v474
        %v478 = vmul.f32 %v463, %v471
        %v479 = vmul.f32 %v464, %v475
        %480 = vst [vmem:[#allocation2 + $0x60] sm:$0xff] %v478
        %481 = vst [vmem:[#allocation2 + $0x68] sm:$0xff] %v479
        %482 = vrot.lane.b32.xlu0 %v333, 112
        %v483 = vpop.permute.xlu0 %482
        %484 = vrot.lane.b32.xlu0 %v334, 112
        %v485 = vpop.permute.xlu0 %484
        %vm486 = vcmp.lt.s32.totalorder %v340, 112
        %v487 = vsel %vm486, %v483, %v485
        %v488 = vsel %vm486, %v485, %v483
        %s489 = scalar_lea.vmem [#allocation9], 7
        %v490 = vld [vmem:[%s489] ss:$8 sm:$0x3]
        %v492 = vlaneseq
        %v493 = vshrl.u32 %v492, 7
        %v494 = vsub.s32 0, %v493
        %v495 = vrot.slane %v490, %v494
        %v496 = vlaneseq
        %v497 = vshrl.u32 %v496, 7
        %v498 = vsub.s32 1, %v497
        %v499 = vrot.slane %v490, %v498
        %v502 = vmul.f32 %v487, %v495
        %v503 = vmul.f32 %v488, %v499
        %504 = vst [vmem:[#allocation2 + $0x70] sm:$0xff] %v502
        %505 = vst [vmem:[#allocation2 + $0x78] sm:$0xff] %v503
        %506 = vrot.lane.b32.xlu0 %v333, 111
        %v507 = vpop.permute.xlu0 %506
        %508 = vrot.lane.b32.xlu0 %v334, 111
        %v509 = vpop.permute.xlu0 %508
        %vm510 = vcmp.lt.s32.totalorder %v340, 111
        %v511 = vsel %vm510, %v507, %v509
        %v512 = vsel %vm510, %v509, %v507
        %s513 = scalar_lea.vmem [#allocation9], 16
        %v514 = vld [vmem:[%s513] ss:$8 sm:$0x3]
        %v516 = vlaneseq
        %v517 = vshrl.u32 %v516, 7
        %v518 = vsub.s32 0, %v517
        %v519 = vrot.slane %v514, %v518
        %v520 = vlaneseq
        %v521 = vshrl.u32 %v520, 7
        %v522 = vsub.s32 1, %v521
        %v523 = vrot.slane %v514, %v522
        %v526 = vmul.f32 %v511, %v519
        %v527 = vmul.f32 %v512, %v523
        %528 = vst [vmem:[#allocation2 + $0x80] sm:$0xff] %v526
        %529 = vst [vmem:[#allocation2 + $0x88] sm:$0xff] %v527
        %v530 = vlaneseq
        %vm531 = vcmp.ge.s32.totalorder %v530, 0
        %vm532 = vcmp.lt.s32.totalorder %v530, 256
        %vm533 = vmand %vm531, %vm532
        %s534 = scalar_lea.vmem [#allocation2], 144
        %535 = vst.msk [vmem:[%s534] ss:$8 sm:$0x3] %vm533, 1.0
        %536 = vst.msk [vmem:[%s534] ss:$8 sm:$0x0] %vm533, 1.0
        %v537 = vld [vmem:[#allocation8] sm:$0xff]
        %v538 = vld [vmem:[#allocation8 + $0x8] sm:$0xff]
        %v539 = vld [vmem:[#allocation8 + $0x10] sm:$0xff]
        %v540 = vld [vmem:[#allocation8 + $0x18] sm:$0xff]
        %v541 = vld [vmem:[#allocation2] sm:$0xff]
        %v542 = vld [vmem:[#allocation2 + $0x8] sm:$0xff]
        %v543 = vld [vmem:[#allocation2 + $0x10] sm:$0xff]
        %v544 = vld [vmem:[#allocation2 + $0x18] sm:$0xff]
        %v545 = vld [vmem:[#allocation2 + $0x20] sm:$0xff]
        %v546 = vld [vmem:[#allocation2 + $0x28] sm:$0xff]
        %v547 = vld [vmem:[#allocation2 + $0x30] sm:$0xff]
        %v548 = vld [vmem:[#allocation2 + $0x38] sm:$0xff]
        %v549 = vld [vmem:[#allocation2 + $0x40] sm:$0xff]
        %v550 = vld [vmem:[#allocation2 + $0x48] sm:$0xff]
        %v551 = vld [vmem:[#allocation2 + $0x50] sm:$0xff]
        %v552 = vld [vmem:[#allocation2 + $0x58] sm:$0xff]
        %v553 = vld [vmem:[#allocation2 + $0x60] sm:$0xff]
        %v554 = vld [vmem:[#allocation2 + $0x68] sm:$0xff]
        %v555 = vld [vmem:[#allocation2 + $0x70] sm:$0xff]
        %v556 = vld [vmem:[#allocation2 + $0x78] sm:$0xff]
        %v557 = vld [vmem:[#allocation2 + $0x80] sm:$0xff]
        %v558 = vld [vmem:[#allocation2 + $0x88] sm:$0xff]
        %v559 = vld [vmem:[#allocation2 + $0x90] sm:$0x1]
        %v560 = vld [vmem:[#allocation2 + $0x98] sm:$0x1]
        %vm561 = vcmask 596992
        %v563 = vsel %vm561, %v537, 0
        %v566 = vsel %vm561, %v538, 0
        %v569 = vsel %vm561, %v539, 0
        %v572 = vsel %vm561, %v540, 0
        %vm574 = vcmask 1040384
        %v576 = vsel %vm574, %v559, 0
        %v579 = vsel %vm574, %v560, 0
        %581 = vmatprep.subr.mxu0 0.0
        %582 = vmatpush1.msra.mxu0 0.0
        %583 = vmatprep.subr.mxu0 0.0
        %584 = vmatpush1.msra.mxu0 0.0
        %585 = vmatprep.subr.mxu0 0.0
        %586 = vmatpush1.msra.mxu0 0.0
        %587 = vmatprep.subr.mxu0 0.0
        %588 = vmatpush1.msra.mxu0 0.0
        %589 = vmatprep.subr.mxu0 0.0
        %590 = vmatpush1.msra.mxu0 0.0
        %591 = vmatprep.subr.mxu0 0.0
        %592 = vmatpush1.msra.mxu0 0.0
        %593 = vmatprep.subr.mxu0 %v579
        %594 = vmatpush1.msra.mxu0 %v576
        %595 = vmatprep.subr.mxu0 %v558
        %596 = vmatpush1.msra.mxu0 %v557
        %597 = vmatprep.subr.mxu0 %v556
        %598 = vmatpush1.msra.mxu0 %v555
        %599 = vmatprep.subr.mxu0 %v554
        %600 = vmatpush1.msra.mxu0 %v553
        %601 = vmatprep.subr.mxu0 %v552
        %602 = vmatpush1.msra.mxu0 %v551
        %603 = vmatprep.subr.mxu0 %v550
        %604 = vmatpush1.msra.mxu0 %v549
        %605 = vmatprep.subr.mxu0 %v548
        %606 = vmatpush1.msra.mxu0 %v547
        %607 = vmatprep.subr.mxu0 %v546
        %608 = vmatpush1.msra.mxu0 %v545
        %609 = vmatprep.subr.mxu0 %v544
        %610 = vmatpush1.msra.mxu0 %v543
        %611 = vmatprep.subr.mxu0 %v542
        %612 = vmatpush1.msra.mxu0 %v541
        %613 = vmatprep.subr.mxu0 0.0
        %614 = vmatpush2.msra.mxu0 0.0
        %615 = vmatprep.subr.mxu0 0.0
        %616 = vmatpush2.msra.mxu0 0.0
        %617 = vmatprep.subr.mxu0 0.0
        %618 = vmatpush2.msra.mxu0 0.0
        %619 = vmatprep.subr.mxu0 0.0
        %620 = vmatpush2.msra.mxu0 0.0
        %621 = vmatprep.subr.mxu0 0.0
        %622 = vmatpush2.msra.mxu0 0.0
        %623 = vmatprep.subr.mxu0 0.0
        %624 = vmatpush2.msra.mxu0 0.0
        %625 = vmatprep.subr.mxu0 0.0
        %626 = vmatpush2.msra.mxu0 0.0
        %627 = vmatprep.subr.mxu0 0.0
        %628 = vmatpush2.msra.mxu0 0.0
        %629 = vmatprep.subr.mxu0 0.0
        %630 = vmatpush2.msra.mxu0 0.0
        %631 = vmatprep.subr.mxu0 0.0
        %632 = vmatpush2.msra.mxu0 0.0
        %633 = vmatprep.subr.mxu0 0.0
        %634 = vmatpush2.msra.mxu0 0.0
        %635 = vmatprep.subr.mxu0 0.0
        %636 = vmatpush2.msra.mxu0 0.0
        %637 = vmatprep.subr.mxu0 0.0
        %638 = vmatpush2.msra.mxu0 0.0
        %639 = vmatprep.subr.mxu0 0.0
        %640 = vmatpush2.msra.mxu0 0.0
        %641 = vmatprep.subr.mxu0 0.0
        %642 = vmatpush2.msra.mxu0 0.0
        %643 = vmatprep.subr.mxu0 0.0
        %644 = vmatpush2.msra.mxu0 0.0
        %645 = vmatprep.mubr.f32.mxu0 0.0
        %646 = vmatmul.mubr.f32.gmra.mxu0 %v563
        %v647 = vpop.f32.mrf.mxu0
        %v648 = vadd.f32 0.0, %v647
        %v649 = vpop.f32.mrf.mxu0
        %v650 = vadd.f32 0.0, %v649
        %651 = vmatprep.mubr.f32.mxu0 0.0
        %652 = vmatmul.mubr.f32.gmra.mxu0 %v566
        %v653 = vpop.f32.mrf.mxu0
        %v654 = vadd.f32 0.0, %v653
        %v655 = vpop.f32.mrf.mxu0
        %v656 = vadd.f32 0.0, %v655
        %657 = vmatprep.mubr.f32.mxu0 0.0
        %658 = vmatmul.mubr.f32.gmra.mxu0 %v569
        %v659 = vpop.f32.mrf.mxu0
        %v660 = vadd.f32 0.0, %v659
        %v661 = vpop.f32.mrf.mxu0
        %v662 = vadd.f32 0.0, %v661
        %663 = vmatprep.mubr.f32.mxu0 0.0
        %664 = vmatmul.mubr.f32.gmra.mxu0 %v572
        %v665 = vpop.f32.mrf.mxu0
        %v666 = vadd.f32 0.0, %v665
        %v667 = vpop.f32.mrf.mxu0
        %v668 = vadd.f32 0.0, %v667
        %669 = vdwg.mxu0
        %v670 = vsub.f32 0.0, %v660
        %v671 = vsub.f32 0.0, %v662
        %v672 = vmul.f32 %v670, 1.442695
        %v673 = vpow.pop %v672
        %v674 = vmul.f32 %v671, 1.442695
        %v675 = vpow.pop %v674
        %v676 = vadd.f32 %v673, 1.0
        %v677 = vadd.f32 %v675, 1.0
        %v678 = vrcp.pop %v676
        %v679 = vrcp.pop %v677
        %v680 = vsub.f32 0.0, %v666
        %v681 = vsub.f32 0.0, %v668
        %v682 = vmul.f32 %v680, 1.442695
        %v683 = vpow.pop %v682
        %v684 = vmul.f32 %v681, 1.442695
        %v685 = vpow.pop %v684
        %v686 = vadd.f32 %v683, 1.0
        %v687 = vadd.f32 %v685, 1.0
        %v688 = vrcp.pop %v686
        %v689 = vrcp.pop %v687
        %v690 = vmul.f32 %v648, %v678
        %v691 = vmul.f32 %v650, %v679
        %v692 = vmul.f32 %v654, %v688
        %v693 = vmul.f32 %v656, %v689
        %v694 = vadd.f32 %v690, %v692
        %v695 = vadd.f32 %v691, %v693
        %696 = vset.pattern.permute.xlu0 2
        %697 = vperm.xlu0 %696, %v308
        %v698 = vpop.permute.xlu0 %697
        %v700 = vadd.f32 %v694, %v698
        %v701 = vadd.f32 %v695, %v698
        %v702 = vmax.f32 %v700, 0.0
        %v703 = vmax.f32 %v701, 0.0
        %704 = vst [vmem:[%s307] sm:$0xff] %v702
        %705 = vst [vmem:[%s307 + $0x8] sm:$0xff] %v703
        %s706 = sand.u32 %s149, 1
        %s707 = scalar_lea.sflag [#allocation5], %s706
        %s708 = sand.u32 %s149, 1
        %s709 = smul.addr %s708, 16
        %s710 = scalar_lea.vmem [#allocation11], %s709
        // Predicated region
        $region57: #{tpu_custom_call.1} parent=39 // pred_check
          %p711 = pneg %p159
        $region58: #{tpu_custom_call.1} parent=39 // pred_check_branch
          %713 = sbr.rel (%p711) target = $region60
        $region59: #{tpu_custom_call.1} parent=39 // pred_region
          %s715 = ssub.s32 256, 256
          %716 = vsyncadd %s707, %s715
          %s717 = smul.addr %s26, 2
          %s718 = smul.addr %s717, 128
          %s719 = scalar_lea.hbm %s5, %s718
          %s721 = sshll.u32 %s710, 4
          %s722 = int_to_ptr.vmem [resolvable:$true] %s721
          %724 = dma.vmem_to_hbm [thread:$0]  %s722, 256, %s719, %s707
        $region60: #{tpu_custom_call.1} parent=39 // pred_fallthru
          _
      $region40: #{tpu_custom_call.1} parent=5 // pred_fallthru
        _
      %p725 = scmp.le.s32.totalorder 2, %s21
      // Predicated region
      $region61: #{tpu_custom_call.1} parent=5 // pred_check
        %p726 = pneg %p725
      $region62: #{tpu_custom_call.1} parent=5 // pred_check_branch
        %728 = sbr.rel (%p726) target = $region64
      $region63: #{tpu_custom_call.1} parent=5 // pred_region
        %s729 = ssub.s32 %s21, 2
        // Predicated region
        $region65: #{tpu_custom_call.1} parent=63 // pred_check
          %p730 = pneg %p165
        $region66: #{tpu_custom_call.1} parent=63 // pred_check_branch
          %732 = sbr.rel (%p730) target = $region68
        $region67: #{tpu_custom_call.1} parent=63 // pred_region
          %s733 = sand.u32 %s150, 1
          %s734 = scalar_lea.sflag [#allocation5], %s733
          %s735 = sand.u32 %s150, 1
          %s736 = smul.addr %s735, 16
          %s737 = scalar_lea.vmem [#allocation11], %s736
          %738 = dma.done %s734, 256
        $region68: #{tpu_custom_call.1} parent=63 // pred_fallthru
          _
      $region64: #{tpu_custom_call.1} parent=5 // pred_fallthru
        _
    $region6: #{tpu_custom_call.1} parent=1 // loop_footer
      %s25 = sadd.s32 1, %s21
    $region7: #{tpu_custom_call.1} parent=1 // loop_footer_branch
      %20 = sbr.rel target = $region3
    $region8: #{tpu_custom_call.1} parent=1 // loop_exit
      _
    %739 = vsyncpa [#allocation4], 1
    %s740 = scalar_lea.sflag [#allocation4], 1
    %741 = vsyncpa %s740, 1
    %742 = vsyncpa [#allocation7], 1
    %s743 = scalar_lea.sflag [#allocation7], 1
    %744 = vsyncpa %s743, 1
    %745 = vsyncpa [#allocation10], 1
    %746 = vsyncpa [#allocation5], 1
    %s747 = scalar_lea.sflag [#allocation5], 1
    %748 = vsyncpa %s747, 1

</llo_original>
